<compile_context>
chip_gen: v5e
topology: v5e:2x2
jax: 0.10.0
libtpu: 0.0.40
codegen_flags: <defaults>
</compile_context>

<pallas_src>
import functools

import jax
import jax.numpy as jnp
from jax import lax
from jax.experimental import pallas as pl
from jax.experimental.pallas import tpu as pltpu

LANES = 128
ACC_ROWS = 8            # (8,128) f32 accumulator = one vreg
MAX_TILE_ROWS = 2048    # (2048,128) f32 = 1 MiB per input block


def _num_core_splits():
    """2 TensorCore splits on dual-TC chips (v7x), 1 on single-TC v5e/v6e."""
    try:
        kind = jax.local_devices()[0].device_kind.lower()
    except Exception:
        return 1
    # TODO(synk): on v7x, confirm the leading "parallel" axis truly megacore-
    # shards; if a trace shows it running serially, switch it to
    # pltpu.CORE_PARALLEL.
    return 2 if "v7" in kind else 1


def _focal_loss_kernel(pred_ref, true_ref, out_ref, acc_ref, *,
                       gamma, alpha, valid_rows, inv_n, tile_rows, n_inner):
    c = pl.program_id(0)            # core-split axis ("parallel")
    j = pl.program_id(1)            # sequential reduction axis ("arbitrary")
    g = c * n_inner + j             # global (unclamped) row-tile index

    @pl.when(j == 0)
    def _():
        acc_ref[...] = jnp.zeros_like(acc_ref)

    x = pred_ref[...].astype(jnp.float32)   # (tile_rows, LANES)
    t = true_ref[...].astype(jnp.float32)

    # Numerically stable BCE-with-logits; e = exp(-|x|) is shared w/ the sigmoid.
    e = jnp.exp(-jnp.abs(x))
    bce = jnp.maximum(x, 0.0) - x * t + jnp.log1p(e)

    # sigmoid via approx reciprocal (EUP push) + one Newton step (f32-accurate).
    d = 1.0 + e
    r = pl.reciprocal(d, approx=True)
    r = r * (2.0 - d * r)
    p = jnp.where(x >= 0.0, r, e * r)       # sigmoid(x)

    # Algebraically collapsed focal weights:
    #   1 - p_t      = p + t - 2*p*t
    #   alpha_factor = (2*alpha - 1)*t + (1 - alpha)
    m = p + t - 2.0 * (p * t)
    af = (2.0 * alpha - 1.0) * t + (1.0 - alpha)
    if gamma == 1.5:
        mod = m * jnp.sqrt(m)               # m**1.5: one sqrt + one mul
    elif gamma == 2.0:
        mod = m * m
    elif gamma == 1.0:
        mod = m
    else:
        mod = m ** gamma
    loss = bce * (af * mod)

    n_fold = tile_rows // ACC_ROWS

    def fold(v):                            # (tile_rows,128)->(8,128), VPU adds
        return jnp.sum(v.reshape(n_fold, ACC_ROWS, LANES), axis=0)

    # Row-granular mask: only the ragged last real tile and clamped duplicate
    # tiles need it; interior tiles skip the iota/select work entirely.
    needs_mask = (g + 1) * tile_rows > valid_rows

    @pl.when(jnp.logical_not(needs_mask))
    def _():
        acc_ref[...] += fold(loss)

    @pl.when(needs_mask)
    def _():
        row_ids = lax.broadcasted_iota(jnp.int32, (tile_rows, LANES), 0)
        # Select (not multiply-by-zero) so NaN/Inf computed on Pallas block
        # padding rows can never leak into the accumulator.
        acc_ref[...] += fold(
            jnp.where(g * tile_rows + row_ids < valid_rows, loss, 0.0))

    @pl.when(j == pl.num_programs(1) - 1)
    def _():
        # Per-core partial contribution to the mean (lane-dense (8,128) slab);
        # the wrapper does the tiny final cross-lane/cross-core sum.
        out_ref[0] = acc_ref[...] * inv_n


def _focal_terms(x, t, gamma, alpha):
    """Pure-JAX focal loss terms (only used for the <128-element lane tail)."""
    e = jnp.exp(-jnp.abs(x))
    bce = jnp.maximum(x, 0.0) - x * t + jnp.log1p(e)
    p = jax.nn.sigmoid(x)
    m = p + t - 2.0 * p * t
    af = (2.0 * alpha - 1.0) * t + (1.0 - alpha)
    return bce * af * (m ** gamma)


def focal_loss(pred, true, gamma=1.5, alpha=0.25):
    """Focal loss over BCE-with-logits, mean reduction (PyTorch default)."""
    assert pred.shape == true.shape
    n_valid = int(pred.size)
    gamma = float(gamma)
    alpha = float(alpha)

    flat_p = pred.reshape(-1)
    flat_t = true.reshape(-1)

    rows = n_valid // LANES          # full 128-lanes rows handled by the kernel
    n_main = rows * LANES
    tail = n_valid - n_main          # <128 ragged elements handled wrapper-side

    total = jnp.zeros((), jnp.float32)

    if rows > 0:
        # Lane-dense 2-D view.  When n_valid % 128 == 0 (common NCHW case) this
        # is a pure bitcast; otherwise slice off the small tail instead of
        # jnp.pad-copying both full tensors.
        p2d = (flat_p if tail == 0 else flat_p[:n_main]).reshape(rows, LANES)
        t2d = (flat_t if tail == 0 else flat_t[:n_main]).reshape(rows, LANES)

        # Multiple of 16 rows so bf16 inputs also hit native (16,128) tiles.
        tile_rows = min(MAX_TILE_ROWS, ((rows + 15) // 16) * 16)
        n_tiles = (rows + tile_rows - 1) // tile_rows
        num_splits = max(1, min(_num_core_splits(), n_tiles))
        n_inner = (n_tiles + num_splits - 1) // num_splits

        kernel = functools.partial(
            _focal_loss_kernel,
            gamma=gamma, alpha=alpha,
            valid_rows=rows, inv_n=1.0 / float(n_valid),
            tile_rows=tile_rows, n_inner=n_inner)

        def in_map(c, j):
            # Clamp so duplicate tiles on an over-provisioned split stay in
            # bounds; their rows are fully masked out in-kernel.
            return (jnp.minimum(c * n_inner + j, n_tiles - 1), 0)

        out = pl.pallas_call(
            kernel,
            out_shape=jax.ShapeDtypeStruct((num_splits, ACC_ROWS, LANES),
                                           jnp.float32),
            grid_spec=pltpu.PrefetchScalarGridSpec(
                num_scalar_prefetch=0,
                grid=(num_splits, n_inner),
                in_specs=[
                    pl.BlockSpec((tile_rows, LANES), in_map),
                    pl.BlockSpec((tile_rows, LANES), in_map),
                ],
                out_specs=pl.BlockSpec((1, ACC_ROWS, LANES),
                                       lambda c, j: (c, 0, 0)),
                scratch_shapes=[pltpu.VMEM((ACC_ROWS, LANES), jnp.float32)],
            ),
            compiler_params=pltpu.CompilerParams(
                dimension_semantics=("parallel", "arbitrary")),
        )(p2d, t2d)

        # Tiny (num_splits*8*128 element) cross-lane + cross-core reduce.
        total = jnp.sum(out)

    if tail:
        xt = flat_p[n_main:].astype(jnp.float32)
        tt = flat_t[n_main:].astype(jnp.float32)
        total = total + jnp.sum(_focal_terms(xt, tt, gamma, alpha)) / n_valid

    return total


def _focal_loss_ref(pred, true, gamma=1.5, alpha=0.25):
    x = pred.astype(jnp.float32)
    t = true.astype(jnp.float32)
    bce = jnp.maximum(x, 0.0) - x * t + jnp.log1p(jnp.exp(-jnp.abs(x)))
    p = jax.nn.sigmoid(x)
    p_t = t * p + (1.0 - t) * (1.0 - p)
    alpha_factor = t * alpha + (1.0 - t) * (1.0 - alpha)
    loss = bce * alpha_factor * (1.0 - p_t) ** gamma
    return loss.mean()


if __name__ == "__main__":
    key = jax.random.PRNGKey(0)
    k1, k2 = jax.random.split(key)
    # Detection-head logits, NCHW: batch=2, channels=4, spatial 16x16.
    pred = jax.random.normal(k1, (2, 4, 16, 16), dtype=jnp.float32) * 2.0
    # Binary labels passed as bf16 (exact for {0,1}) to halve label HBM bytes.
    true = (jax.random.uniform(k2, (2, 4, 16, 16)) > 0.8).astype(jnp.bfloat16)

    out = focal_loss(pred, true, gamma=1.5, alpha=0.25)
    out = jax.block_until_ready(out)

    ref = _focal_loss_ref(pred, true, gamma=1.5, alpha=0.25)
    assert jnp.allclose(out, ref, rtol=1e-5, atol=1e-6), (out, ref)
    print("KERNEL_OK")
</pallas_src>

<mosaic_0001>
module attributes {stable_mosaic.version = 11 : i64} {
  func.func @_focal_loss_kernel(%arg0: i32, %arg1: i32, %arg2: memref<16x128xf32, #tpu.memory_space<vmem>>, %arg3: memref<16x128xbf16, #tpu.memory_space<vmem>>, %arg4: memref<1x8x128xf32, #tpu.memory_space<vmem>>, %arg5: memref<8x128xf32, #tpu.memory_space<vmem>>) attributes {dimension_semantics = [#tpu.dimension_semantics<parallel>, #tpu.dimension_semantics<arbitrary>], iteration_bounds = array<i64: 1, 1>, scalar_prefetch = 0 : i64, scratch_operands = 1 : i64, tpu.core_type = #tpu.core_type<tc>, window_params = [{transform_indices = @transform_0, window_bounds = array<i64: 16, 128>}, {transform_indices = @transform_1, window_bounds = array<i64: 16, 128>}, {transform_indices = @transform_2, window_bounds = array<i64: 1, 8, 128>}]} {
    %c1_i32 = arith.constant 1 : i32
    %0 = arith.muli %arg0, %c1_i32 : i32
    %1 = arith.addi %0, %arg1 : i32
    %c0_i32 = arith.constant 0 : i32
    %2 = arith.cmpi eq, %arg1, %c0_i32 : i32
    %3 = arith.extui %2 : i1 to i32
    %c0_i32_0 = arith.constant 0 : i32
    %4 = arith.cmpi ne, %3, %c0_i32_0 : i32
    scf.if %4 {
      %cst_17 = arith.constant 0.000000e+00 : f32
      %53 = vector.broadcast %cst_17 : f32 to vector<8x128xf32>
      %c0_18 = arith.constant 0 : index
      %c0_19 = arith.constant 0 : index
      %54 = vector.load %arg5[%c0_18, %c0_19] : memref<8x128xf32, #tpu.memory_space<vmem>>, vector<8x128xf32>
      tpu.vector_store %arg5[%c0_18, %c0_19], %53 {strides = array<i32>} : memref<8x128xf32, #tpu.memory_space<vmem>>, vector<8x128xf32>,
    } else {
    }
    %c0 = arith.constant 0 : index
    %c0_1 = arith.constant 0 : index
    %5 = vector.load %arg2[%c0, %c0_1] : memref<16x128xf32, #tpu.memory_space<vmem>>, vector<16x128xf32>
    %c0_2 = arith.constant 0 : index
    %c0_3 = arith.constant 0 : index
    %6 = vector.load %arg3[%c0_2, %c0_3] : memref<16x128xbf16, #tpu.memory_space<vmem>>, vector<16x128xbf16>
    %7 = arith.extf %6 : vector<16x128xbf16> to vector<16x128xf32>
    %8 = math.absf %5 : vector<16x128xf32>
    %cst = arith.constant 0.000000e+00 : f32
    %9 = vector.broadcast %cst : f32 to vector<16x128xf32>
    %10 = arith.subf %9, %8 : vector<16x128xf32>
    %11 = math.exp %10 : vector<16x128xf32>
    %cst_4 = arith.constant 0.000000e+00 : f32
    %12 = vector.broadcast %cst_4 : f32 to vector<16x128xf32>
    %13 = arith.maximumf %5, %12 : vector<16x128xf32>
    %14 = arith.mulf %5, %7 : vector<16x128xf32>
    %15 = arith.subf %13, %14 : vector<16x128xf32>
    %16 = math.log1p %11 : vector<16x128xf32>
    %17 = arith.addf %15, %16 : vector<16x128xf32>
    %cst_5 = arith.constant 1.000000e+00 : f32
    %18 = vector.broadcast %cst_5 : f32 to vector<16x128xf32>
    %19 = arith.addf %18, %11 : vector<16x128xf32>
    %20 = tpu.reciprocal %19 {approx = true} : vector<16x128xf32> -> vector<16x128xf32>
    %21 = arith.mulf %19, %20 : vector<16x128xf32>
    %cst_6 = arith.constant 2.000000e+00 : f32
    %22 = vector.broadcast %cst_6 : f32 to vector<16x128xf32>
    %23 = arith.subf %22, %21 : vector<16x128xf32>
    %24 = arith.mulf %20, %23 : vector<16x128xf32>
    %cst_7 = arith.constant 0.000000e+00 : f32
    %25 = vector.broadcast %cst_7 : f32 to vector<16x128xf32>
    %26 = arith.cmpf oge, %5, %25 : vector<16x128xf32>
    %27 = arith.mulf %11, %24 : vector<16x128xf32>
    %28 = arith.select %26, %24, %27 : vector<16x128xi1>, vector<16x128xf32>
    %29 = arith.addf %28, %7 : vector<16x128xf32>
    %30 = arith.mulf %28, %7 : vector<16x128xf32>
    %cst_8 = arith.constant 2.000000e+00 : f32
    %31 = vector.broadcast %cst_8 : f32 to vector<16x128xf32>
    %32 = arith.mulf %31, %30 : vector<16x128xf32>
    %33 = arith.subf %29, %32 : vector<16x128xf32>
    %cst_9 = arith.constant -5.000000e-01 : f32
    %34 = vector.broadcast %cst_9 : f32 to vector<16x128xf32>
    %35 = arith.mulf %34, %7 : vector<16x128xf32>
    %cst_10 = arith.constant 7.500000e-01 : f32
    %36 = vector.broadcast %cst_10 : f32 to vector<16x128xf32>
    %37 = arith.addf %35, %36 : vector<16x128xf32>
    %38 = math.sqrt %33 : vector<16x128xf32>
    %39 = arith.mulf %33, %38 : vector<16x128xf32>
    %40 = arith.mulf %37, %39 : vector<16x128xf32>
    %41 = arith.mulf %17, %40 : vector<16x128xf32>
    %c1_i32_11 = arith.constant 1 : i32
    %42 = arith.addi %1, %c1_i32_11 : i32
    %c16_i32 = arith.constant 16 : i32
    %43 = arith.muli %42, %c16_i32 : i32
    %c16_i32_12 = arith.constant 16 : i32
    %44 = arith.cmpi sgt, %43, %c16_i32_12 : i32
    %true = arith.constant true
    %45 = arith.xori %44, %true : i1
    %46 = arith.extui %45 : i1 to i32
    %c0_i32_13 = arith.constant 0 : i32
    %47 = arith.cmpi ne, %46, %c0_i32_13 : i32
    scf.if %47 {
      %c0_17 = arith.constant 0 : index
      %c0_18 = arith.constant 0 : index
      %53 = vector.load %arg5[%c0_17, %c0_18] : memref<8x128xf32, #tpu.memory_space<vmem>>, vector<8x128xf32>
      %54 = vector.shape_cast %41 : vector<16x128xf32> to vector<2x8x128xf32>
      %cst_19 = arith.constant dense<0.000000e+00> : vector<8x128xf32>
      %55 = vector.multi_reduction <add>, %54, %cst_19 [0] : vector<2x8x128xf32> to vector<8x128xf32>
      %56 = arith.addf %53, %55 : vector<8x128xf32>
      %c0_20 = arith.constant 0 : index
      %c0_21 = arith.constant 0 : index
      %57 = vector.load %arg5[%c0_20, %c0_21] : memref<8x128xf32, #tpu.memory_space<vmem>>, vector<8x128xf32>
      tpu.vector_store %arg5[%c0_20, %c0_21], %56 {strides = array<i32>} : memref<8x128xf32, #tpu.memory_space<vmem>>, vector<8x128xf32>,
    } else {
    }
    %48 = arith.extui %44 : i1 to i32
    %c0_i32_14 = arith.constant 0 : i32
    %49 = arith.cmpi ne, %48, %c0_i32_14 : i32
    scf.if %49 {
      %53 = tpu.iota {dimensions = array<i32: 0>} : vector<16x128xi32>
      %c0_17 = arith.constant 0 : index
      %c0_18 = arith.constant 0 : index
      %54 = vector.load %arg5[%c0_17, %c0_18] : memref<8x128xf32, #tpu.memory_space<vmem>>, vector<8x128xf32>
      %c16_i32_19 = arith.constant 16 : i32
      %55 = arith.muli %1, %c16_i32_19 : i32
      %56 = vector.broadcast %55 : i32 to vector<16x128xi32>
      %57 = arith.addi %56, %53 : vector<16x128xi32>
      %c16_i32_20 = arith.constant 16 : i32
      %58 = vector.broadcast %c16_i32_20 : i32 to vector<16x128xi32>
      %59 = arith.cmpi slt, %57, %58 : vector<16x128xi32>
      %cst_21 = arith.constant 0.000000e+00 : f32
      %60 = vector.broadcast %cst_21 : f32 to vector<16x128xf32>
      %61 = arith.select %59, %41, %60 : vector<16x128xi1>, vector<16x128xf32>
      %62 = vector.shape_cast %61 : vector<16x128xf32> to vector<2x8x128xf32>
      %cst_22 = arith.constant dense<0.000000e+00> : vector<8x128xf32>
      %63 = vector.multi_reduction <add>, %62, %cst_22 [0] : vector<2x8x128xf32> to vector<8x128xf32>
      %64 = arith.addf %54, %63 : vector<8x128xf32>
      %c0_23 = arith.constant 0 : index
      %c0_24 = arith.constant 0 : index
      %65 = vector.load %arg5[%c0_23, %c0_24] : memref<8x128xf32, #tpu.memory_space<vmem>>, vector<8x128xf32>
      tpu.vector_store %arg5[%c0_23, %c0_24], %64 {strides = array<i32>} : memref<8x128xf32, #tpu.memory_space<vmem>>, vector<8x128xf32>,
    } else {
    }
    %c0_i32_15 = arith.constant 0 : i32
    %50 = arith.cmpi eq, %arg1, %c0_i32_15 : i32
    %51 = arith.extui %50 : i1 to i32
    %c0_i32_16 = arith.constant 0 : i32
    %52 = arith.cmpi ne, %51, %c0_i32_16 : i32
    scf.if %52 {
      %c0_17 = arith.constant 0 : index
      %c0_18 = arith.constant 0 : index
      %53 = vector.load %arg5[%c0_17, %c0_18] : memref<8x128xf32, #tpu.memory_space<vmem>>, vector<8x128xf32>
      %cst_19 = arith.constant 4.8828125E-4 : f32
      %54 = vector.broadcast %cst_19 : f32 to vector<8x128xf32>
      %55 = arith.mulf %53, %54 : vector<8x128xf32>
      %c0_20 = arith.constant 0 : index
      %c0_21 = arith.constant 0 : index
      %c0_22 = arith.constant 0 : index
      %56 = vector.load %arg4[%c0_20, %c0_21, %c0_22] : memref<1x8x128xf32, #tpu.memory_space<vmem>>, vector<1x8x128xf32>
      %57 = vector.shape_cast %56 : vector<1x8x128xf32> to vector<8x128xf32>
      %58 = vector.shape_cast %55 : vector<8x128xf32> to vector<1x8x128xf32>
      tpu.vector_store %arg4[%c0_20, %c0_21, %c0_22], %58 {strides = array<i32>} : memref<1x8x128xf32, #tpu.memory_space<vmem>>, vector<1x8x128xf32>,
    } else {
    }
    return
  }
  func.func @transform_0(%arg0: i32, %arg1: i32) -> (i32, i32) {
    %c1_i32 = arith.constant 1 : i32
    %0 = arith.muli %arg0, %c1_i32 : i32
    %1 = arith.addi %0, %arg1 : i32
    %c0_i32 = arith.constant 0 : i32
    %2 = arith.minsi %1, %c0_i32 : i32
    %c0_i32_0 = arith.constant 0 : i32
    %c0_i32_1 = arith.constant 0 : i32
    return %2, %c0_i32_0 : i32, i32
  }
  func.func @transform_1(%arg0: i32, %arg1: i32) -> (i32, i32) {
    %c1_i32 = arith.constant 1 : i32
    %0 = arith.muli %arg0, %c1_i32 : i32
    %1 = arith.addi %0, %arg1 : i32
    %c0_i32 = arith.constant 0 : i32
    %2 = arith.minsi %1, %c0_i32 : i32
    %c0_i32_0 = arith.constant 0 : i32
    %c0_i32_1 = arith.constant 0 : i32
    return %2, %c0_i32_0 : i32, i32
  }
  func.func @transform_2(%arg0: i32, %arg1: i32) -> (i32, i32, i32) {
    %c0_i32 = arith.constant 0 : i32
    %c0_i32_0 = arith.constant 0 : i32
    %c0_i32_1 = arith.constant 0 : i32
    return %arg0, %c0_i32, %c0_i32_0 : i32, i32, i32
  }
}

</mosaic_0001>

<llo_original>
// kernel: tpu_custom_call.1
$region0: #{tpu_custom_call.1}
  #allocation0 [shape = 'u32[]', space=smem, size = 0x4, offset = 0x4, fixed_abs, tag = 'smem constant byte address 0x4 - core index']
  #allocation1 [shape = 'u32[72,128]{1,0:T(1,128)}', space=vmem, size = 0x9000, scoped, tag = 'internal scratch']
  #allocation2 [shape = 'f32[8,128]{1,0:T(8,128)}', space=vmem, size = 0x1000, scoped, tag = 'scratch operand']
  %s0 = inlined_call_operand.hbm [shape: f32[16,128], index: 0, kind: input, shape index: {}]
  %s1 = inlined_call_operand.hbm [shape: bf16[16,128], index: 1, kind: input, shape index: {}]
  %s2 = inlined_call_operand.hbm [shape: f32[1,8,128], index: 2, kind: output, shape index: {}]
  %s3 = sld [smem:[#allocation0]]
  $region42: #{tpu_custom_call.1} parent=0
    _
  %s5 = ssub.s32 1, %s3
  %s6 = scalar_select 0, %s5, %s3
  $region1: #{tpu_custom_call.1} parent=0
    #allocation3 [shape = 'u8[8192]{0}', space=vmem, size = 0x2000, scoped, tag = 'input window, operand 0, single buffered']
    #allocation4 [shape = 's32[1]{0}', space=sflag, size = 0x4, scoped, tag = 'scoped memory for tpu_custom_call.1']
    #allocation5 [shape = 's32[1]{0}', space=sflag, size = 0x4, scoped, tag = 'scoped memory for tpu_custom_call.1']
    #allocation6 [shape = 'u8[4096]{0}', space=vmem, size = 0x1000, scoped, tag = 'input window, operand 1, single buffered']
    #allocation7 [shape = 's32[1]{0}', space=sflag, size = 0x4, scoped, tag = 'scoped memory for tpu_custom_call.1']
    #allocation8 [shape = 'u8[4096]{0}', space=vmem, size = 0x1000, scoped, tag = 'output window, operand 0, single buffered']
    %7 = vsyncpa [#allocation4], 0
    %8 = vsyncpa [#allocation7], 0
    %9 = vsyncpa [#allocation5], 0
    // Predicated region
    $region2: #{tpu_custom_call.1} parent=1 // pred_check
      _
    $region3: #{tpu_custom_call.1} parent=1 // pred_check_branch
      %11 = sbr.rel (0) target = $region5
    $region4: #{tpu_custom_call.1} parent=1 // pred_region
      %s12 = sadd.s32 0, 0
      %p13 = scmp.lt.s32.totalorder %s12, 0
      %s14 = scalar_select %p13, %s12, 0
      %s15 = smul.u32 2, %s14
      %17 = vsyncadd [#allocation4], 0
      %s18 = smul.addr %s15, 8
      %s19 = scalar_lea.hbm %s0, %s18
      %s20 = sshll.u32 %s19, 4
      %s21 = int_to_ptr.hbm [resolvable:$true] %s20
      %s22 = sshll.u32 [#allocation3], 4
      %s23 = int_to_ptr.vmem [resolvable:$true] %s22
      %28 = dma.hbm_to_vmem [thread:$0]  %s21, 256, %s23, [#allocation4], 128, 128, 8
    $region5: #{tpu_custom_call.1} parent=1 // pred_fallthru
      _
    // Predicated region
    $region6: #{tpu_custom_call.1} parent=1 // pred_check
      _
    $region7: #{tpu_custom_call.1} parent=1 // pred_check_branch
      %30 = sbr.rel (0) target = $region9
    $region8: #{tpu_custom_call.1} parent=1 // pred_region
      %s31 = sadd.s32 0, 0
      %p32 = scmp.lt.s32.totalorder %s31, 0
      %s33 = scalar_select %p32, %s31, 0
      %s34 = smul.u32 2, %s33
      %36 = vsyncadd [#allocation7], 0
      %s37 = smul.addr %s34, 4
      %s38 = scalar_lea.hbm %s1, %s37
      %s39 = sshll.u32 %s38, 4
      %s40 = int_to_ptr.hbm [resolvable:$true] %s39
      %s41 = sshll.u32 [#allocation6], 4
      %s42 = int_to_ptr.vmem [resolvable:$true] %s41
      %47 = dma.hbm_to_vmem [thread:$0]  %s40, 128, %s42, [#allocation7], 64, 64, 4
    $region9: #{tpu_custom_call.1} parent=1 // pred_fallthru
      _
    // Predicated region
    $region10: #{tpu_custom_call.1} parent=1 // pred_check
      _
    $region11: #{tpu_custom_call.1} parent=1 // pred_check_branch
      %49 = sbr.rel (0) target = $region13
    $region12: #{tpu_custom_call.1} parent=1 // pred_region
      %51 = dma.done [#allocation4], 256
    $region13: #{tpu_custom_call.1} parent=1 // pred_fallthru
      _
    // Predicated region
    $region14: #{tpu_custom_call.1} parent=1 // pred_check
      _
    $region15: #{tpu_custom_call.1} parent=1 // pred_check_branch
      %53 = sbr.rel (0) target = $region17
    $region16: #{tpu_custom_call.1} parent=1 // pred_region
      %55 = dma.done [#allocation7], 128
    $region17: #{tpu_custom_call.1} parent=1 // pred_fallthru
      _
    %s56 = sadd.s32 0, 0
    %p57 = scmp.lt.s32.totalorder %s56, 0
    %s58 = scalar_select %p57, %s56, 0
    %s59 = smul.u32 2, %s58
    %s60 = sadd.s32 0, 0
    %p61 = scmp.lt.s32.totalorder %s60, 0
    %s62 = scalar_select %p61, %s60, 0
    %s63 = smul.u32 2, %s62
    %s64 = sadd.s32 0, 0
    %p65 = scmp.eq.s32.totalorder 0, 0
    // Predicated region
    $region18: #{tpu_custom_call.1} parent=1 // pred_check
      %p66 = pneg %p65
    $region19: #{tpu_custom_call.1} parent=1 // pred_check_branch
      %68 = sbr.rel (%p66) target = $region21
    $region20: #{tpu_custom_call.1} parent=1 // pred_region
      %69 = vst [vmem:[#allocation2] sm:$0xff] 0.0
    $region21: #{tpu_custom_call.1} parent=1 // pred_fallthru
      _
    %v70 = vld [vmem:[#allocation3] sm:$0xff]
    %v71 = vld [vmem:[#allocation3 + $0x8] sm:$0xff]
    %v72 = vld [vmem:[#allocation6] sm:$0xf]
    %v73 = vld [vmem:[#allocation6 + $0x4] sm:$0xf]
    %v74 = vunpack.c.l.bf16 %v72
    %v75 = vunpack.c.l.bf16 %v73
    %v76 = vand.u32 2147483647, %v70
    %v77 = vand.u32 2147483647, %v71
    %v78 = vsub.f32 0.0, %v76
    %v79 = vsub.f32 0.0, %v77
    %v80 = vmul.f32 %v78, 1.442695
    %v81 = vpow.pop %v80
    %v82 = vmul.f32 %v79, 1.442695
    %v83 = vpow.pop %v82
    %v84 = vmax.f32 %v70, 0.0
    %v85 = vmax.f32 %v71, 0.0
    %v86 = vmul.f32 %v70, %v74
    %v87 = vmul.f32 %v71, %v75
    %v88 = vsub.f32 %v84, %v86
    %v89 = vsub.f32 %v85, %v87
    %v90 = vadd.f32 %v81, 1.0
    %v91 = vlog2.pop %v90
    %v92 = vmul.f32 %v91, 0.6931472
    %v93 = vmul.f32 -0.5, %v81
    %v94 = vadd.f32 %v93, 1.0
    %v95 = vmul.f32 %v94, %v81
    %v96 = vand.u32 2147483647, %v81
    %vm97 = vcmp.lt.f32.partialorder %v96, 0.0004427343
    %v98 = vsel %vm97, %v95, %v92
    %v99 = vadd.f32 %v83, 1.0
    %v100 = vlog2.pop %v99
    %v101 = vmul.f32 %v100, 0.6931472
    %v102 = vmul.f32 -0.5, %v83
    %v103 = vadd.f32 %v102, 1.0
    %v104 = vmul.f32 %v103, %v83
    %v105 = vand.u32 2147483647, %v83
    %vm106 = vcmp.lt.f32.partialorder %v105, 0.0004427343
    %v107 = vsel %vm106, %v104, %v101
    %v108 = vadd.f32 %v88, %v98
    %v109 = vadd.f32 %v89, %v107
    %v110 = vadd.f32 %v81, 1.0
    %v111 = vadd.f32 %v83, 1.0
    %v112 = vrcp.pop %v110
    %v113 = vrcp.pop %v111
    %v114 = vmul.f32 %v110, %v112
    %v115 = vmul.f32 %v111, %v113
    %v116 = vsub.f32 2.0, %v114
    %v117 = vsub.f32 2.0, %v115
    %v118 = vmul.f32 %v112, %v116
    %v119 = vmul.f32 %v113, %v117
    %vm120 = vcmp.ge.f32.partialorder %v70, 0.0
    %vm121 = vcmp.ge.f32.partialorder %v71, 0.0
    %v122 = vmul.f32 %v81, %v118
    %v123 = vmul.f32 %v83, %v119
    %v124 = vsel %vm120, %v118, %v122
    %v125 = vsel %vm121, %v119, %v123
    %v126 = vadd.f32 %v124, %v74
    %v127 = vadd.f32 %v125, %v75
    %v128 = vmul.f32 %v124, %v74
    %v129 = vmul.f32 %v125, %v75
    %v130 = vmul.f32 %v128, 2.0
    %v131 = vmul.f32 %v129, 2.0
    %v132 = vsub.f32 %v126, %v130
    %v133 = vsub.f32 %v127, %v131
    %v134 = vmul.f32 %v74, -0.5
    %v135 = vmul.f32 %v75, -0.5
    %v136 = vadd.f32 %v134, 0.75
    %v137 = vadd.f32 %v135, 0.75
    %v138 = vrsqrt.pop %v132
    %v139 = vmul.f32 %v138, %v132
    %v140 = vmul.f32 %v139, %v138
    %v141 = vmul.f32 0.5, %v140
    %v142 = vsub.f32 1.5, %v141
    %v143 = vmul.f32 %v138, %v142
    %v144 = vmul.f32 %v132, %v143
    %vm145 = vcmp.eq.f32.partialorder %v132, inf
    %v146 = vsel %vm145, %v132, %v144
    %vm147 = vcmp.eq.f32.partialorder %v132, 0.0
    %v148 = vand.u32 %v132, 2147483648
    %v149 = vsel %vm147, %v148, %v146
    %v150 = vrsqrt.pop %v133
    %v151 = vmul.f32 %v150, %v133
    %v152 = vmul.f32 %v151, %v150
    %v153 = vmul.f32 0.5, %v152
    %v154 = vsub.f32 1.5, %v153
    %v155 = vmul.f32 %v150, %v154
    %v156 = vmul.f32 %v133, %v155
    %vm157 = vcmp.eq.f32.partialorder %v133, inf
    %v158 = vsel %vm157, %v133, %v156
    %vm159 = vcmp.eq.f32.partialorder %v133, 0.0
    %v160 = vand.u32 %v133, 2147483648
    %v161 = vsel %vm159, %v160, %v158
    %v162 = vmul.f32 %v132, %v149
    %v163 = vmul.f32 %v133, %v161
    %v164 = vmul.f32 %v136, %v162
    %v165 = vmul.f32 %v137, %v163
    %v166 = vmul.f32 %v108, %v164
    %v167 = vmul.f32 %v109, %v165
    %s168 = sadd.s32 %s64, 1
    %s169 = smul.u32 %s168, 16
    %p170 = scmp.gt.s32.totalorder %s169, 16
    %p171 = scmp.le.s32.totalorder %s169, 16
    // Predicated region
    $region22: #{tpu_custom_call.1} parent=1 // pred_check
      %p172 = pneg %p171
    $region23: #{tpu_custom_call.1} parent=1 // pred_check_branch
      %174 = sbr.rel (%p172) target = $region25
    $region24: #{tpu_custom_call.1} parent=1 // pred_region
      %v175 = vld [vmem:[#allocation2] sm:$0xff]
      %v176 = vadd.f32 %v166, %v167
      %v177 = vadd.f32 %v175, %v176
      %178 = vst [vmem:[#allocation2] sm:$0xff] %v177
    $region25: #{tpu_custom_call.1} parent=1 // pred_fallthru
      _
    // Predicated region
    $region26: #{tpu_custom_call.1} parent=1 // pred_check
      %p179 = pneg %p170
    $region27: #{tpu_custom_call.1} parent=1 // pred_check_branch
      %181 = sbr.rel (%p179) target = $region29
    $region28: #{tpu_custom_call.1} parent=1 // pred_region
      %v182 = vlaneseq
      %v183 = vshrl.u32 %v182, 7
      %v184 = vadd.s32 %v183, 8
      %v185 = vld [vmem:[#allocation2] sm:$0xff]
      %s186 = smul.u32 %s64, 16
      %v187 = vstv %s186
      %v188 = vadd.s32 %v187, %v183
      %v189 = vadd.s32 %v187, %v184
      %vm190 = vcmp.lt.s32.totalorder %v188, 16
      %vm191 = vcmp.lt.s32.totalorder %v189, 16
      %v192 = vsel %vm190, %v166, 0.0
      %v193 = vsel %vm191, %v167, 0.0
      %v194 = vadd.f32 %v192, %v193
      %v195 = vadd.f32 %v185, %v194
      %196 = vst [vmem:[#allocation2] sm:$0xff] %v195
    $region29: #{tpu_custom_call.1} parent=1 // pred_fallthru
      _
    // Predicated region
    $region30: #{tpu_custom_call.1} parent=1 // pred_check
      %p197 = pneg %p65
    $region31: #{tpu_custom_call.1} parent=1 // pred_check_branch
      %199 = sbr.rel (%p197) target = $region33
    $region32: #{tpu_custom_call.1} parent=1 // pred_region
      %v200 = vld [vmem:[#allocation2] sm:$0xff]
      %v201 = vmul.f32 %v200, 0.00048828125
      %202 = vst [vmem:[#allocation8] sm:$0xff] %v201
    $region33: #{tpu_custom_call.1} parent=1 // pred_fallthru
      _
    // Predicated region
    $region34: #{tpu_custom_call.1} parent=1 // pred_check
      _
    $region35: #{tpu_custom_call.1} parent=1 // pred_check_branch
      %204 = sbr.rel (0) target = $region37
    $region36: #{tpu_custom_call.1} parent=1 // pred_region
      %206 = vsyncadd [#allocation5], 0
      %s208 = sshll.u32 [#allocation8], 4
      %s209 = int_to_ptr.vmem [resolvable:$true] %s208
      %s210 = sshll.u32 %s2, 4
      %s211 = int_to_ptr.hbm [resolvable:$true] %s210
      %213 = dma.vmem_to_hbm [thread:$0]  %s209, 128, %s211, [#allocation5]
    $region37: #{tpu_custom_call.1} parent=1 // pred_fallthru
      _
    // Predicated region
    $region38: #{tpu_custom_call.1} parent=1 // pred_check
      _
    $region39: #{tpu_custom_call.1} parent=1 // pred_check_branch
      %215 = sbr.rel (0) target = $region41
    $region40: #{tpu_custom_call.1} parent=1 // pred_region
      %217 = dma.done [#allocation5], 128
    $region41: #{tpu_custom_call.1} parent=1 // pred_fallthru
      _
    %218 = vsyncpa [#allocation4], 1
    %219 = vsyncpa [#allocation7], 1
    %220 = vsyncpa [#allocation5], 1

</llo_original>
